<compile_context>
chip_gen: v7x
topology: tpu7x:2x2x1
jax: 0.10.0
libtpu: 0.0.40
codegen_flags: <defaults>
</compile_context>

<pallas_src>
import jax
import jax.numpy as jnp
from jax.experimental import pallas as pl
from jax.experimental.pallas import tpu as pltpu


_LAYERS = ("fc1", "fc2", "fc2_1", "fc2_1_1", "fc2_1_2", "fc2_2", "fc3")
_N_LAYERS = len(_LAYERS)
_PAD = 128      # per-layer lane-width slot in the packed slabs
_OUT_PAD = 8    # lane width of the kernel output block (real output: col 0)


def _round_up(x, m):
    return (x + m - 1) // m * m


def _mlp_kernel(w_ref, b_ref, x_ref, o_ref):
    """Full padded MLP chain on one (TB, F) batch tile, all in VMEM."""
    x = x_ref[...]                                   # (TB, F) float32
    tb, f_in = x.shape

    # ---- layer 0 (fc1): (TB, F) @ (F, 128) against the first F slab rows ----
    if f_in <= 8:
        # Tiny fan-in: unrolled VPU broadcast multiply-add, same exact math,
        # no sub-8-contraction MXU pass.
        y = jnp.zeros((tb, _PAD), jnp.float32)
        for f in range(f_in):
            y = y + x[:, f:f + 1] * w_ref[f:f + 1, 0:_PAD]
    else:
        y = jnp.dot(x, w_ref[0:f_in, 0:_PAD],
                    preferred_element_type=jnp.float32)
    h = jnp.maximum(y + b_ref[:, 0:_PAD], 0.0)       # (TB, 128)

    # ---- layers 1..6: uniform (TB,128) @ (128,128) padded MXU passes ----
    for li in range(1, _N_LAYERS):
        col = li * _PAD
        w = w_ref[:, col:col + _PAD]                 # (128, 128) static slice
        b = b_ref[:, col:col + _PAD]                 # (1, 128) broadcasts
        y = jnp.dot(h, w, preferred_element_type=jnp.float32) + b
        # dropout layers (after fc2_1_1 and fc2_2) are eval-mode identity
        h = jnp.maximum(y, 0.0) if li < _N_LAYERS - 1 else y

    # Narrow (TB, 8) store; real output lives in column 0, rest are exact zeros.
    o_ref[...] = h[:, 0:_OUT_PAD].astype(o_ref.dtype)


def _pack_params(params):
    """Pack all weights/biases into two zero-padded slabs.

    Weight slab: (128, 7*128); layer i's (in_i, out_i) weight sits at
    rows [:in_i], cols [i*128 : i*128+out_i].  Bias slab: (1, 7*128) with the
    bias in the layer's column slot.  Zero padding guarantees the padded lanes
    of every activation stay exactly zero through the chain.
    """
    w_slab = jnp.zeros((_PAD, _N_LAYERS * _PAD), jnp.float32)
    b_slab = jnp.zeros((1, _N_LAYERS * _PAD), jnp.float32)
    for i, name in enumerate(_LAYERS):
        w, b = params[name]
        fin, fout = w.shape
        assert fin <= _PAD and fout <= _PAD, (
            f"layer {name} shape {w.shape} exceeds the {_PAD}-wide slab slot")
        w_slab = w_slab.at[:fin, i * _PAD:i * _PAD + fout].set(
            w.astype(jnp.float32))
        b_slab = b_slab.at[0, i * _PAD:i * _PAD + fout].set(
            b.astype(jnp.float32))
    return w_slab, b_slab


def _choose_tiling(B, tb_max=512):
    """Pick (TB, B_pad): 8-aligned tile, capped at tb_max, with an EVEN number
    of grid steps whenever the batch is big enough to split — so the parallel
    batch axis keeps both v7x TensorCores busy and balanced (no-op on v5e/v6e).
    """
    b8 = _round_up(max(B, 1), 8)
    if b8 <= 8:
        return b8, b8                     # single 8-row tile, 1 step
    n = 2
    while _round_up(-(-b8 // n), 8) > tb_max:
        n += 2
    tb = _round_up(-(-b8 // n), 8)
    return tb, tb * n


def weightnet0_forward(x, params, *, tb_max=512):
    """x: [B, input_size] float32.  params: dict name -> (w[in,out], b[out])."""
    B, F = x.shape
    assert F <= _PAD, f"input_size {F} exceeds the {_PAD}-wide slab slot"
    out_size = params["fc3"][0].shape[1]
    assert out_size <= _OUT_PAD

    w_slab, b_slab = _pack_params(params)

    TB, B_pad = _choose_tiling(B, tb_max)
    grid = (B_pad // TB,)

    # Pad only the batch rows (F columns, not 128 — no lane-padding round trip).
    x_in = x.astype(jnp.float32)
    if B_pad != B:
        x_in = jnp.pad(x_in, ((0, B_pad - B), (0, 0)))

    # Advisory cost estimate (real, unpadded work) for the XLA scheduler.
    flops = 2 * B * (3 * 8 + 8 * 32 + 32 * 64 + 64 * 64 + 64 * 32
                     + 32 * 16 + 16 * 1)
    bytes_accessed = (B_pad * F * 4 + B_pad * _OUT_PAD * 4
                      + w_slab.size * 4 + b_slab.size * 4)
    cost = pl.CostEstimate(flops=flops, transcendentals=0,
                           bytes_accessed=bytes_accessed)

    out_pad = pl.pallas_call(
        _mlp_kernel,
        out_shape=jax.ShapeDtypeStruct((B_pad, _OUT_PAD), jnp.float32),
        grid=grid,
        in_specs=[
            # params: same block every step -> fetched once, VMEM-resident
            pl.BlockSpec((_PAD, _N_LAYERS * _PAD), lambda i: (0, 0)),
            pl.BlockSpec((1, _N_LAYERS * _PAD), lambda i: (0, 0)),
            # input: tiled over the batch; last dim == full array dim (legal)
            pl.BlockSpec((TB, F), lambda i: (i, 0)),
        ],
        # narrow output block; last dim == full array dim (legal)
        out_specs=pl.BlockSpec((TB, _OUT_PAD), lambda i: (i, 0)),
        compiler_params=pltpu.CompilerParams(
            dimension_semantics=("parallel",)),  # 2x on v7x megacore
        cost_estimate=cost,
    )(w_slab, b_slab, x_in)

    # Undo the padding: real batch rows, real output column(s).
    return out_pad[:B, :out_size]


def init_params(key, input_size=3, hidden_size1=8, hidden_size2=16,
                output_size=1):
    """Deterministic synthetic parameters.  Weights stored as [in, out]."""
    dims = [
        ("fc1", input_size, hidden_size1),
        ("fc2", hidden_size1, hidden_size2 * 2),
        ("fc2_1", hidden_size2 * 2, hidden_size2 * 4),
        ("fc2_1_1", hidden_size2 * 4, hidden_size2 * 4),
        ("fc2_1_2", hidden_size2 * 4, hidden_size2 * 2),
        ("fc2_2", hidden_size2 * 2, hidden_size2),
        ("fc3", hidden_size2, output_size),
    ]
    params = {}
    for name, fan_in, fan_out in dims:
        key, kw, kb = jax.random.split(key, 3)
        bound = 1.0 / (fan_in ** 0.5)  # matches nn.Linear default init range
        w = jax.random.uniform(kw, (fan_in, fan_out), jnp.float32, -bound, bound)
        b = jax.random.uniform(kb, (fan_out,), jnp.float32, -bound, bound)
        params[name] = (w, b)
    return params


def reference_forward(x, params):
    """Pure-JAX reference of the same forward pass (eval-mode dropout)."""
    h = x
    for name in _LAYERS[:-1]:
        w, b = params[name]
        h = jnp.maximum(h @ w + b, 0.0)
    w, b = params["fc3"]
    return h @ w + b


if __name__ == "__main__":
    key = jax.random.PRNGKey(0)
    key, xkey = jax.random.split(key)

    B, INPUT_SIZE = 8, 3
    x = jax.random.normal(xkey, (B, INPUT_SIZE), dtype=jnp.float32)
    params = init_params(key)

    out = weightnet0_forward(x, params)
    out = jax.block_until_ready(out)

    ref = reference_forward(x, params)
    assert out.shape == (B, 1), out.shape
    assert jnp.allclose(out, ref, atol=1e-5, rtol=1e-5), (
        f"mismatch: max abs err {jnp.max(jnp.abs(out - ref))}"
    )

    # Also exercise a batch that spans multiple grid steps (even 2-step grid,
    # non-multiple of TB).
    key, x2key = jax.random.split(key)
    B2 = 600
    x2 = jax.random.normal(x2key, (B2, INPUT_SIZE), dtype=jnp.float32)
    out2 = jax.block_until_ready(weightnet0_forward(x2, params))
    ref2 = reference_forward(x2, params)
    assert out2.shape == (B2, 1), out2.shape
    assert jnp.allclose(out2, ref2, atol=1e-4, rtol=1e-4), (
        f"mismatch: max abs err {jnp.max(jnp.abs(out2 - ref2))}"
    )

    # Large batch: multiple even grid steps with TB capped at 512.
    key, x3key = jax.random.split(key)
    B3 = 4100
    x3 = jax.random.normal(x3key, (B3, INPUT_SIZE), dtype=jnp.float32)
    out3 = jax.block_until_ready(weightnet0_forward(x3, params))
    ref3 = reference_forward(x3, params)
    assert out3.shape == (B3, 1), out3.shape
    assert jnp.allclose(out3, ref3, atol=1e-4, rtol=1e-4), (
        f"mismatch: max abs err {jnp.max(jnp.abs(out3 - ref3))}"
    )

    print("KERNEL_OK")
</pallas_src>

<mosaic_0001>
module attributes {stable_mosaic.version = 11 : i64} {
  func.func @_mlp_kernel(%arg0: i32, %arg1: memref<128x896xf32, #tpu.memory_space<vmem>>, %arg2: memref<1x896xf32, #tpu.memory_space<vmem>>, %arg3: memref<8x3xf32, #tpu.memory_space<vmem>>, %arg4: memref<8x8xf32, #tpu.memory_space<vmem>>) attributes {dimension_semantics = [#tpu.dimension_semantics<parallel>], iteration_bounds = array<i64: 1>, scalar_prefetch = 0 : i64, scratch_operands = 0 : i64, tpu.core_type = #tpu.core_type<tc>, window_params = [{pipeline_mode = #tpu.pipeline_mode<synchronous>, transform_indices = @transform_0, window_bounds = array<i64: 128, 896>}, {pipeline_mode = #tpu.pipeline_mode<synchronous>, transform_indices = @transform_1, window_bounds = array<i64: 1, 896>}, {transform_indices = @transform_2, window_bounds = array<i64: 8, 3>}, {transform_indices = @transform_3, window_bounds = array<i64: 8, 8>}]} {
    %c0 = arith.constant 0 : index
    %c0_0 = arith.constant 0 : index
    %0 = vector.load %arg3[%c0, %c0_0] : memref<8x3xf32, #tpu.memory_space<vmem>>, vector<8x3xf32>
    %cst = arith.constant 0.000000e+00 : f32
    %1 = vector.broadcast %cst : f32 to vector<8x128xf32>
    %2 = vector.extract_strided_slice %0 {offsets = [0, 0], sizes = [8, 1], strides = [1, 1]} : vector<8x3xf32> to vector<8x1xf32>
    %c0_1 = arith.constant 0 : index
    %c0_2 = arith.constant 0 : index
    %3 = vector.load %arg1[%c0_1, %c0_2] : memref<128x896xf32, #tpu.memory_space<vmem>>, vector<1x128xf32>
    %4 = vector.broadcast %2 : vector<8x1xf32> to vector<8x128xf32>
    %5 = vector.broadcast %3 : vector<1x128xf32> to vector<8x128xf32>
    %6 = arith.mulf %4, %5 : vector<8x128xf32>
    %7 = arith.addf %1, %6 : vector<8x128xf32>
    %8 = vector.extract_strided_slice %0 {offsets = [0, 1], sizes = [8, 1], strides = [1, 1]} : vector<8x3xf32> to vector<8x1xf32>
    %c1 = arith.constant 1 : index
    %c0_3 = arith.constant 0 : index
    %9 = vector.load %arg1[%c1, %c0_3] : memref<128x896xf32, #tpu.memory_space<vmem>>, vector<1x128xf32>
    %10 = vector.broadcast %8 : vector<8x1xf32> to vector<8x128xf32>
    %11 = vector.broadcast %9 : vector<1x128xf32> to vector<8x128xf32>
    %12 = arith.mulf %10, %11 : vector<8x128xf32>
    %13 = arith.addf %7, %12 : vector<8x128xf32>
    %14 = vector.extract_strided_slice %0 {offsets = [0, 2], sizes = [8, 1], strides = [1, 1]} : vector<8x3xf32> to vector<8x1xf32>
    %c2 = arith.constant 2 : index
    %c0_4 = arith.constant 0 : index
    %15 = vector.load %arg1[%c2, %c0_4] : memref<128x896xf32, #tpu.memory_space<vmem>>, vector<1x128xf32>
    %16 = vector.broadcast %14 : vector<8x1xf32> to vector<8x128xf32>
    %17 = vector.broadcast %15 : vector<1x128xf32> to vector<8x128xf32>
    %18 = arith.mulf %16, %17 : vector<8x128xf32>
    %19 = arith.addf %13, %18 : vector<8x128xf32>
    %c0_5 = arith.constant 0 : index
    %c0_6 = arith.constant 0 : index
    %20 = vector.load %arg2[%c0_5, %c0_6] : memref<1x896xf32, #tpu.memory_space<vmem>>, vector<1x128xf32>
    %21 = vector.broadcast %20 : vector<1x128xf32> to vector<8x128xf32>
    %22 = arith.addf %19, %21 : vector<8x128xf32>
    %cst_7 = arith.constant 0.000000e+00 : f32
    %23 = vector.broadcast %cst_7 : f32 to vector<8x128xf32>
    %24 = arith.maximumf %22, %23 : vector<8x128xf32>
    %c0_8 = arith.constant 0 : index
    %c128 = arith.constant 128 : index
    %25 = vector.load %arg1[%c0_8, %c128] : memref<128x896xf32, #tpu.memory_space<vmem>>, vector<128x128xf32>
    %c0_9 = arith.constant 0 : index
    %c128_10 = arith.constant 128 : index
    %26 = vector.load %arg2[%c0_9, %c128_10] : memref<1x896xf32, #tpu.memory_space<vmem>>, vector<1x128xf32>
    %cst_11 = arith.constant dense<0.000000e+00> : vector<8x128xf32>
    %27 = tpu.matmul %24, %25, %cst_11 {dimension_numbers = #tpu.dot_dimension_numbers<[1], [0], [0], [1], [0, 0, 1, 1], [], []>} : vector<8x128xf32>, vector<128x128xf32>, vector<8x128xf32> -> vector<8x128xf32>
    %28 = vector.broadcast %26 : vector<1x128xf32> to vector<8x128xf32>
    %29 = arith.addf %27, %28 : vector<8x128xf32>
    %cst_12 = arith.constant 0.000000e+00 : f32
    %30 = vector.broadcast %cst_12 : f32 to vector<8x128xf32>
    %31 = arith.maximumf %29, %30 : vector<8x128xf32>
    %c0_13 = arith.constant 0 : index
    %c256 = arith.constant 256 : index
    %32 = vector.load %arg1[%c0_13, %c256] : memref<128x896xf32, #tpu.memory_space<vmem>>, vector<128x128xf32>
    %c0_14 = arith.constant 0 : index
    %c256_15 = arith.constant 256 : index
    %33 = vector.load %arg2[%c0_14, %c256_15] : memref<1x896xf32, #tpu.memory_space<vmem>>, vector<1x128xf32>
    %cst_16 = arith.constant dense<0.000000e+00> : vector<8x128xf32>
    %34 = tpu.matmul %31, %32, %cst_16 {dimension_numbers = #tpu.dot_dimension_numbers<[1], [0], [0], [1], [0, 0, 1, 1], [], []>} : vector<8x128xf32>, vector<128x128xf32>, vector<8x128xf32> -> vector<8x128xf32>
    %35 = vector.broadcast %33 : vector<1x128xf32> to vector<8x128xf32>
    %36 = arith.addf %34, %35 : vector<8x128xf32>
    %cst_17 = arith.constant 0.000000e+00 : f32
    %37 = vector.broadcast %cst_17 : f32 to vector<8x128xf32>
    %38 = arith.maximumf %36, %37 : vector<8x128xf32>
    %c0_18 = arith.constant 0 : index
    %c384 = arith.constant 384 : index
    %39 = vector.load %arg1[%c0_18, %c384] : memref<128x896xf32, #tpu.memory_space<vmem>>, vector<128x128xf32>
    %c0_19 = arith.constant 0 : index
    %c384_20 = arith.constant 384 : index
    %40 = vector.load %arg2[%c0_19, %c384_20] : memref<1x896xf32, #tpu.memory_space<vmem>>, vector<1x128xf32>
    %cst_21 = arith.constant dense<0.000000e+00> : vector<8x128xf32>
    %41 = tpu.matmul %38, %39, %cst_21 {dimension_numbers = #tpu.dot_dimension_numbers<[1], [0], [0], [1], [0, 0, 1, 1], [], []>} : vector<8x128xf32>, vector<128x128xf32>, vector<8x128xf32> -> vector<8x128xf32>
    %42 = vector.broadcast %40 : vector<1x128xf32> to vector<8x128xf32>
    %43 = arith.addf %41, %42 : vector<8x128xf32>
    %cst_22 = arith.constant 0.000000e+00 : f32
    %44 = vector.broadcast %cst_22 : f32 to vector<8x128xf32>
    %45 = arith.maximumf %43, %44 : vector<8x128xf32>
    %c0_23 = arith.constant 0 : index
    %c512 = arith.constant 512 : index
    %46 = vector.load %arg1[%c0_23, %c512] : memref<128x896xf32, #tpu.memory_space<vmem>>, vector<128x128xf32>
    %c0_24 = arith.constant 0 : index
    %c512_25 = arith.constant 512 : index
    %47 = vector.load %arg2[%c0_24, %c512_25] : memref<1x896xf32, #tpu.memory_space<vmem>>, vector<1x128xf32>
    %cst_26 = arith.constant dense<0.000000e+00> : vector<8x128xf32>
    %48 = tpu.matmul %45, %46, %cst_26 {dimension_numbers = #tpu.dot_dimension_numbers<[1], [0], [0], [1], [0, 0, 1, 1], [], []>} : vector<8x128xf32>, vector<128x128xf32>, vector<8x128xf32> -> vector<8x128xf32>
    %49 = vector.broadcast %47 : vector<1x128xf32> to vector<8x128xf32>
    %50 = arith.addf %48, %49 : vector<8x128xf32>
    %cst_27 = arith.constant 0.000000e+00 : f32
    %51 = vector.broadcast %cst_27 : f32 to vector<8x128xf32>
    %52 = arith.maximumf %50, %51 : vector<8x128xf32>
    %c0_28 = arith.constant 0 : index
    %c640 = arith.constant 640 : index
    %53 = vector.load %arg1[%c0_28, %c640] : memref<128x896xf32, #tpu.memory_space<vmem>>, vector<128x128xf32>
    %c0_29 = arith.constant 0 : index
    %c640_30 = arith.constant 640 : index
    %54 = vector.load %arg2[%c0_29, %c640_30] : memref<1x896xf32, #tpu.memory_space<vmem>>, vector<1x128xf32>
    %cst_31 = arith.constant dense<0.000000e+00> : vector<8x128xf32>
    %55 = tpu.matmul %52, %53, %cst_31 {dimension_numbers = #tpu.dot_dimension_numbers<[1], [0], [0], [1], [0, 0, 1, 1], [], []>} : vector<8x128xf32>, vector<128x128xf32>, vector<8x128xf32> -> vector<8x128xf32>
    %56 = vector.broadcast %54 : vector<1x128xf32> to vector<8x128xf32>
    %57 = arith.addf %55, %56 : vector<8x128xf32>
    %cst_32 = arith.constant 0.000000e+00 : f32
    %58 = vector.broadcast %cst_32 : f32 to vector<8x128xf32>
    %59 = arith.maximumf %57, %58 : vector<8x128xf32>
    %c0_33 = arith.constant 0 : index
    %c768 = arith.constant 768 : index
    %60 = vector.load %arg1[%c0_33, %c768] : memref<128x896xf32, #tpu.memory_space<vmem>>, vector<128x128xf32>
    %c0_34 = arith.constant 0 : index
    %c768_35 = arith.constant 768 : index
    %61 = vector.load %arg2[%c0_34, %c768_35] : memref<1x896xf32, #tpu.memory_space<vmem>>, vector<1x128xf32>
    %cst_36 = arith.constant dense<0.000000e+00> : vector<8x128xf32>
    %62 = tpu.matmul %59, %60, %cst_36 {dimension_numbers = #tpu.dot_dimension_numbers<[1], [0], [0], [1], [0, 0, 1, 1], [], []>} : vector<8x128xf32>, vector<128x128xf32>, vector<8x128xf32> -> vector<8x128xf32>
    %63 = vector.broadcast %61 : vector<1x128xf32> to vector<8x128xf32>
    %64 = arith.addf %62, %63 : vector<8x128xf32>
    %65 = vector.extract_strided_slice %64 {offsets = [0, 0], sizes = [8, 8], strides = [1, 1]} : vector<8x128xf32> to vector<8x8xf32>
    %c0_37 = arith.constant 0 : index
    %c0_38 = arith.constant 0 : index
    %66 = vector.load %arg4[%c0_37, %c0_38] : memref<8x8xf32, #tpu.memory_space<vmem>>, vector<8x8xf32>
    tpu.vector_store %arg4[%c0_37, %c0_38], %65 {strides = array<i32>} : memref<8x8xf32, #tpu.memory_space<vmem>>, vector<8x8xf32>,
    return
  }
  func.func @transform_0(%arg0: i32) -> (i32, i32) {
    %c0_i32 = arith.constant 0 : i32
    %c0_i32_0 = arith.constant 0 : i32
    %c0_i32_1 = arith.constant 0 : i32
    return %c0_i32, %c0_i32_0 : i32, i32
  }
  func.func @transform_1(%arg0: i32) -> (i32, i32) {
    %c0_i32 = arith.constant 0 : i32
    %c0_i32_0 = arith.constant 0 : i32
    %c0_i32_1 = arith.constant 0 : i32
    return %c0_i32, %c0_i32_0 : i32, i32
  }
  func.func @transform_2(%arg0: i32) -> (i32, i32) {
    %c0_i32 = arith.constant 0 : i32
    %c0_i32_0 = arith.constant 0 : i32
    return %arg0, %c0_i32 : i32, i32
  }
  func.func @transform_3(%arg0: i32) -> (i32, i32) {
    %c0_i32 = arith.constant 0 : i32
    %c0_i32_0 = arith.constant 0 : i32
    return %arg0, %c0_i32 : i32, i32
  }
}

</mosaic_0001>

<llo_original>
// kernel: tpu_custom_call.1
$region0: #{tpu_custom_call.1}
  #allocation0 [shape = 'u32[]', space=smem, size = 0x4, offset = 0x4, fixed_abs, tag = 'smem constant byte address 0x4 - core index']
  #allocation1 [shape = 'u32[144,128]{1,0:T(1,128)}', space=vmem, size = 0x12000, scoped, tag = 'internal scratch']
  %s0 = inlined_call_operand.hbm [shape: f32[128,896], index: 0, kind: input, shape index: {}]
  %s1 = inlined_call_operand.vmem [shape: f32[1,896], index: 1, kind: input, shape index: {}]
  %s2 = inlined_call_operand.vmem [shape: f32[8,3], index: 2, kind: input, shape index: {}]
  %s3 = inlined_call_operand.hbm [shape: f32[8,8], index: 3, kind: output, shape index: {}]
  %s4 = sld [smem:[#allocation0]]
  $region26: #{tpu_custom_call.1} parent=0
    _
  %s6 = ssub.s32 1, %s4
  %s7 = scalar_select 0, %s6, %s4
  $region1: #{tpu_custom_call.1} parent=0
    #allocation2 [shape = 'u8[458752]{0}', space=vmem, size = 0x70000, scoped, tag = 'input window, operand 0, single buffered']
    #allocation3 [shape = 's32[1]{0}', space=sflag, size = 0x4, scoped, tag = 'scoped memory for tpu_custom_call.1']
    #allocation4 [shape = 's32[1]{0}', space=sflag, size = 0x4, scoped, tag = 'scoped memory for tpu_custom_call.1']
    #allocation5 [shape = 'u8[4096]{0}', space=vmem, size = 0x1000, scoped, tag = 'output window, operand 0, single buffered']
    %8 = vsyncpa [#allocation3], 0
    %9 = vsyncpa [#allocation4], 0
    // Predicated region
    $region2: #{tpu_custom_call.1} parent=1 // pred_check
      _
    $region3: #{tpu_custom_call.1} parent=1 // pred_check_branch
      %11 = sbr.rel (0) target = $region5
    $region4: #{tpu_custom_call.1} parent=1 // pred_region
      %s13 = ssub.s32 14336, 14336
      %14 = vsyncadd [#allocation3], %s13
      %s15 = sshll.u32 [#allocation2], 4
      %s16 = int_to_ptr.vmem [resolvable:$true] %s15
      %21 = dma.hbm_to_vmem [thread:$0]  %s0, 14336, %s16, [#allocation3], 896, 896, 56
    $region5: #{tpu_custom_call.1} parent=1 // pred_fallthru
      _
    // Predicated region
    $region6: #{tpu_custom_call.1} parent=1 // pred_check
      _
    $region7: #{tpu_custom_call.1} parent=1 // pred_check_branch
      %23 = sbr.rel (0) target = $region9
    $region8: #{tpu_custom_call.1} parent=1 // pred_region
      _
    $region9: #{tpu_custom_call.1} parent=1 // pred_fallthru
      _
    // Predicated region
    $region10: #{tpu_custom_call.1} parent=1 // pred_check
      _
    $region11: #{tpu_custom_call.1} parent=1 // pred_check_branch
      %25 = sbr.rel (0) target = $region13
    $region12: #{tpu_custom_call.1} parent=1 // pred_region
      _
    $region13: #{tpu_custom_call.1} parent=1 // pred_fallthru
      _
    // Predicated region
    $region14: #{tpu_custom_call.1} parent=1 // pred_check
      _
    $region15: #{tpu_custom_call.1} parent=1 // pred_check_branch
      %27 = sbr.rel (0) target = $region17
    $region16: #{tpu_custom_call.1} parent=1 // pred_region
      %28 = dma.done [#allocation3], 14336
    $region17: #{tpu_custom_call.1} parent=1 // pred_fallthru
      _
    %v29 = vld [vmem:[%s2] sm:$0xff]
    %v30 = vld [vmem:[#allocation2] ss:$0 sm:$0xff]
    %32 = vset.pattern.permute.xlu0 0
    %33 = vperm.xlu0 %32, %v29
    %v34 = vpop.permute.xlu0 %33
    %v36 = vmul.f32 %v34, %v30
    %v37 = vadd.f32 %v36, 0.0
    %v38 = vld [vmem:[#allocation2 + $0x1] ss:$0 sm:$0xff]
    %39 = vset.pattern.permute.xlu0 1
    %40 = vperm.xlu0 %39, %v29
    %v41 = vpop.permute.xlu0 %40
    %v43 = vmul.f32 %v41, %v38
    %v44 = vadd.f32 %v37, %v43
    %v45 = vld [vmem:[#allocation2 + $0x2] ss:$0 sm:$0xff]
    %46 = vset.pattern.permute.xlu0 2
    %47 = vperm.xlu0 %46, %v29
    %v48 = vpop.permute.xlu0 %47
    %v50 = vmul.f32 %v48, %v45
    %v51 = vadd.f32 %v44, %v50
    %v52 = vld [vmem:[%s1] sm:$0x1]
    %v54 = vlaneseq
    %v55 = vshrl.u32 %v54, 7
    %v56 = vsub.s32 0, %v55
    %v57 = vrot.slane %v52, %v56
    %v59 = vadd.f32 %v51, %v57
    %v60 = vmax.f32 %v59, 0.0
    %v61 = vld [vmem:[#allocation2 + $0x8] sm:$0xff]
    %v62 = vld [vmem:[#allocation2 + $0x40] sm:$0xff]
    %v63 = vld [vmem:[#allocation2 + $0x78] sm:$0xff]
    %v64 = vld [vmem:[#allocation2 + $0xb0] sm:$0xff]
    %v65 = vld [vmem:[#allocation2 + $0xe8] sm:$0xff]
    %v66 = vld [vmem:[#allocation2 + $0x120] sm:$0xff]
    %v67 = vld [vmem:[#allocation2 + $0x158] sm:$0xff]
    %v68 = vld [vmem:[#allocation2 + $0x190] sm:$0xff]
    %v69 = vld [vmem:[#allocation2 + $0x1c8] sm:$0xff]
    %v70 = vld [vmem:[#allocation2 + $0x200] sm:$0xff]
    %v71 = vld [vmem:[#allocation2 + $0x238] sm:$0xff]
    %v72 = vld [vmem:[#allocation2 + $0x270] sm:$0xff]
    %v73 = vld [vmem:[#allocation2 + $0x2a8] sm:$0xff]
    %v74 = vld [vmem:[#allocation2 + $0x2e0] sm:$0xff]
    %v75 = vld [vmem:[#allocation2 + $0x318] sm:$0xff]
    %v76 = vld [vmem:[#allocation2 + $0x350] sm:$0xff]
    %v77 = vld [vmem:[%s1 + $0x1] sm:$0x1]
    %v79 = vlaneseq
    %v80 = vshrl.u32 %v79, 7
    %v81 = vsub.s32 0, %v80
    %v82 = vrot.slane %v77, %v81
    %84 = vmatprep.subr.mxu0 0.0
    %85 = vmatpush1.msra.mxu0 %v61
    %86 = vmatprep.subr.mxu0 0.0
    %87 = vmatpush1.msra.mxu0 %v62
    %88 = vmatprep.subr.mxu0 0.0
    %89 = vmatpush1.msra.mxu0 %v63
    %90 = vmatprep.subr.mxu0 0.0
    %91 = vmatpush1.msra.mxu0 %v64
    %92 = vmatprep.subr.mxu0 0.0
    %93 = vmatpush1.msra.mxu0 %v65
    %94 = vmatprep.subr.mxu0 0.0
    %95 = vmatpush1.msra.mxu0 %v66
    %96 = vmatprep.subr.mxu0 0.0
    %97 = vmatpush1.msra.mxu0 %v67
    %98 = vmatprep.subr.mxu0 0.0
    %99 = vmatpush1.msra.mxu0 %v68
    %100 = vmatprep.subr.mxu0 0.0
    %101 = vmatpush1.msra.mxu0 %v69
    %102 = vmatprep.subr.mxu0 0.0
    %103 = vmatpush1.msra.mxu0 %v70
    %104 = vmatprep.subr.mxu0 0.0
    %105 = vmatpush1.msra.mxu0 %v71
    %106 = vmatprep.subr.mxu0 0.0
    %107 = vmatpush1.msra.mxu0 %v72
    %108 = vmatprep.subr.mxu0 0.0
    %109 = vmatpush1.msra.mxu0 %v73
    %110 = vmatprep.subr.mxu0 0.0
    %111 = vmatpush1.msra.mxu0 %v74
    %112 = vmatprep.subr.mxu0 0.0
    %113 = vmatpush1.msra.mxu0 %v75
    %114 = vmatprep.subr.mxu0 0.0
    %115 = vmatpush1.msra.mxu0 %v76
    %116 = vmatprep.subr.mxu0 0.0
    %117 = vmatpush1.msra.mxu0 0.0
    %118 = vmatprep.subr.mxu0 0.0
    %119 = vmatpush1.msra.mxu0 0.0
    %120 = vmatprep.subr.mxu0 0.0
    %121 = vmatpush1.msra.mxu0 0.0
    %122 = vmatprep.subr.mxu0 0.0
    %123 = vmatpush1.msra.mxu0 0.0
    %124 = vmatprep.subr.mxu0 0.0
    %125 = vmatpush1.msra.mxu0 0.0
    %126 = vmatprep.subr.mxu0 0.0
    %127 = vmatpush1.msra.mxu0 0.0
    %128 = vmatprep.subr.mxu0 0.0
    %129 = vmatpush1.msra.mxu0 0.0
    %130 = vmatprep.subr.mxu0 0.0
    %131 = vmatpush1.msra.mxu0 0.0
    %132 = vmatprep.subr.mxu0 0.0
    %133 = vmatpush1.msra.mxu0 0.0
    %134 = vmatprep.subr.mxu0 0.0
    %135 = vmatpush1.msra.mxu0 0.0
    %136 = vmatprep.subr.mxu0 0.0
    %137 = vmatpush1.msra.mxu0 0.0
    %138 = vmatprep.subr.mxu0 0.0
    %139 = vmatpush1.msra.mxu0 0.0
    %140 = vmatprep.subr.mxu0 0.0
    %141 = vmatpush1.msra.mxu0 0.0
    %142 = vmatprep.subr.mxu0 0.0
    %143 = vmatpush1.msra.mxu0 0.0
    %144 = vmatprep.subr.mxu0 0.0
    %145 = vmatpush1.msra.mxu0 0.0
    %146 = vmatprep.subr.mxu0 0.0
    %147 = vmatpush1.msra.mxu0 0.0
    %148 = vmatprep.mubr.f32.mxu0 0.0
    %149 = vmatmul.mubr.f32.gmra.mrb[0].mxu0 %v60
    %v150 = vpop.f32.mrb[0].mxu0
    %v151 = vadd.f32 %v82, %v150
    %v152 = vpop.f32.mrb[0].mxu0
    %153 = vdwg.mxu0
    %v154 = vmax.f32 %v151, 0.0
    %v155 = vld [vmem:[#allocation2 + $0x10] sm:$0xff]
    %v156 = vld [vmem:[#allocation2 + $0x48] sm:$0xff]
    %v157 = vld [vmem:[#allocation2 + $0x80] sm:$0xff]
    %v158 = vld [vmem:[#allocation2 + $0xb8] sm:$0xff]
    %v159 = vld [vmem:[#allocation2 + $0xf0] sm:$0xff]
    %v160 = vld [vmem:[#allocation2 + $0x128] sm:$0xff]
    %v161 = vld [vmem:[#allocation2 + $0x160] sm:$0xff]
    %v162 = vld [vmem:[#allocation2 + $0x198] sm:$0xff]
    %v163 = vld [vmem:[#allocation2 + $0x1d0] sm:$0xff]
    %v164 = vld [vmem:[#allocation2 + $0x208] sm:$0xff]
    %v165 = vld [vmem:[#allocation2 + $0x240] sm:$0xff]
    %v166 = vld [vmem:[#allocation2 + $0x278] sm:$0xff]
    %v167 = vld [vmem:[#allocation2 + $0x2b0] sm:$0xff]
    %v168 = vld [vmem:[#allocation2 + $0x2e8] sm:$0xff]
    %v169 = vld [vmem:[#allocation2 + $0x320] sm:$0xff]
    %v170 = vld [vmem:[#allocation2 + $0x358] sm:$0xff]
    %v171 = vld [vmem:[%s1 + $0x2] sm:$0x1]
    %v173 = vlaneseq
    %v174 = vshrl.u32 %v173, 7
    %v175 = vsub.s32 0, %v174
    %v176 = vrot.slane %v171, %v175
    %178 = vmatprep.subr.mxu0 0.0
    %179 = vmatpush1.msra.mxu0 %v155
    %180 = vmatprep.subr.mxu0 0.0
    %181 = vmatpush1.msra.mxu0 %v156
    %182 = vmatprep.subr.mxu0 0.0
    %183 = vmatpush1.msra.mxu0 %v157
    %184 = vmatprep.subr.mxu0 0.0
    %185 = vmatpush1.msra.mxu0 %v158
    %186 = vmatprep.subr.mxu0 0.0
    %187 = vmatpush1.msra.mxu0 %v159
    %188 = vmatprep.subr.mxu0 0.0
    %189 = vmatpush1.msra.mxu0 %v160
    %190 = vmatprep.subr.mxu0 0.0
    %191 = vmatpush1.msra.mxu0 %v161
    %192 = vmatprep.subr.mxu0 0.0
    %193 = vmatpush1.msra.mxu0 %v162
    %194 = vmatprep.subr.mxu0 0.0
    %195 = vmatpush1.msra.mxu0 %v163
    %196 = vmatprep.subr.mxu0 0.0
    %197 = vmatpush1.msra.mxu0 %v164
    %198 = vmatprep.subr.mxu0 0.0
    %199 = vmatpush1.msra.mxu0 %v165
    %200 = vmatprep.subr.mxu0 0.0
    %201 = vmatpush1.msra.mxu0 %v166
    %202 = vmatprep.subr.mxu0 0.0
    %203 = vmatpush1.msra.mxu0 %v167
    %204 = vmatprep.subr.mxu0 0.0
    %205 = vmatpush1.msra.mxu0 %v168
    %206 = vmatprep.subr.mxu0 0.0
    %207 = vmatpush1.msra.mxu0 %v169
    %208 = vmatprep.subr.mxu0 0.0
    %209 = vmatpush1.msra.mxu0 %v170
    %210 = vmatprep.subr.mxu0 0.0
    %211 = vmatpush1.msra.mxu0 0.0
    %212 = vmatprep.subr.mxu0 0.0
    %213 = vmatpush1.msra.mxu0 0.0
    %214 = vmatprep.subr.mxu0 0.0
    %215 = vmatpush1.msra.mxu0 0.0
    %216 = vmatprep.subr.mxu0 0.0
    %217 = vmatpush1.msra.mxu0 0.0
    %218 = vmatprep.subr.mxu0 0.0
    %219 = vmatpush1.msra.mxu0 0.0
    %220 = vmatprep.subr.mxu0 0.0
    %221 = vmatpush1.msra.mxu0 0.0
    %222 = vmatprep.subr.mxu0 0.0
    %223 = vmatpush1.msra.mxu0 0.0
    %224 = vmatprep.subr.mxu0 0.0
    %225 = vmatpush1.msra.mxu0 0.0
    %226 = vmatprep.subr.mxu0 0.0
    %227 = vmatpush1.msra.mxu0 0.0
    %228 = vmatprep.subr.mxu0 0.0
    %229 = vmatpush1.msra.mxu0 0.0
    %230 = vmatprep.subr.mxu0 0.0
    %231 = vmatpush1.msra.mxu0 0.0
    %232 = vmatprep.subr.mxu0 0.0
    %233 = vmatpush1.msra.mxu0 0.0
    %234 = vmatprep.subr.mxu0 0.0
    %235 = vmatpush1.msra.mxu0 0.0
    %236 = vmatprep.subr.mxu0 0.0
    %237 = vmatpush1.msra.mxu0 0.0
    %238 = vmatprep.subr.mxu0 0.0
    %239 = vmatpush1.msra.mxu0 0.0
    %240 = vmatprep.subr.mxu0 0.0
    %241 = vmatpush1.msra.mxu0 0.0
    %242 = vmatprep.mubr.f32.mxu0 0.0
    %243 = vmatmul.mubr.f32.gmra.mrb[0].mxu0 %v154
    %v244 = vpop.f32.mrb[0].mxu0
    %v245 = vadd.f32 %v176, %v244
    %v246 = vpop.f32.mrb[0].mxu0
    %247 = vdwg.mxu0
    %v248 = vmax.f32 %v245, 0.0
    %v249 = vld [vmem:[#allocation2 + $0x18] sm:$0xff]
    %v250 = vld [vmem:[#allocation2 + $0x50] sm:$0xff]
    %v251 = vld [vmem:[#allocation2 + $0x88] sm:$0xff]
    %v252 = vld [vmem:[#allocation2 + $0xc0] sm:$0xff]
    %v253 = vld [vmem:[#allocation2 + $0xf8] sm:$0xff]
    %v254 = vld [vmem:[#allocation2 + $0x130] sm:$0xff]
    %v255 = vld [vmem:[#allocation2 + $0x168] sm:$0xff]
    %v256 = vld [vmem:[#allocation2 + $0x1a0] sm:$0xff]
    %v257 = vld [vmem:[#allocation2 + $0x1d8] sm:$0xff]
    %v258 = vld [vmem:[#allocation2 + $0x210] sm:$0xff]
    %v259 = vld [vmem:[#allocation2 + $0x248] sm:$0xff]
    %v260 = vld [vmem:[#allocation2 + $0x280] sm:$0xff]
    %v261 = vld [vmem:[#allocation2 + $0x2b8] sm:$0xff]
    %v262 = vld [vmem:[#allocation2 + $0x2f0] sm:$0xff]
    %v263 = vld [vmem:[#allocation2 + $0x328] sm:$0xff]
    %v264 = vld [vmem:[#allocation2 + $0x360] sm:$0xff]
    %v265 = vld [vmem:[%s1 + $0x3] sm:$0x1]
    %v267 = vlaneseq
    %v268 = vshrl.u32 %v267, 7
    %v269 = vsub.s32 0, %v268
    %v270 = vrot.slane %v265, %v269
    %272 = vmatprep.subr.mxu0 0.0
    %273 = vmatpush1.msra.mxu0 %v249
    %274 = vmatprep.subr.mxu0 0.0
    %275 = vmatpush1.msra.mxu0 %v250
    %276 = vmatprep.subr.mxu0 0.0
    %277 = vmatpush1.msra.mxu0 %v251
    %278 = vmatprep.subr.mxu0 0.0
    %279 = vmatpush1.msra.mxu0 %v252
    %280 = vmatprep.subr.mxu0 0.0
    %281 = vmatpush1.msra.mxu0 %v253
    %282 = vmatprep.subr.mxu0 0.0
    %283 = vmatpush1.msra.mxu0 %v254
    %284 = vmatprep.subr.mxu0 0.0
    %285 = vmatpush1.msra.mxu0 %v255
    %286 = vmatprep.subr.mxu0 0.0
    %287 = vmatpush1.msra.mxu0 %v256
    %288 = vmatprep.subr.mxu0 0.0
    %289 = vmatpush1.msra.mxu0 %v257
    %290 = vmatprep.subr.mxu0 0.0
    %291 = vmatpush1.msra.mxu0 %v258
    %292 = vmatprep.subr.mxu0 0.0
    %293 = vmatpush1.msra.mxu0 %v259
    %294 = vmatprep.subr.mxu0 0.0
    %295 = vmatpush1.msra.mxu0 %v260
    %296 = vmatprep.subr.mxu0 0.0
    %297 = vmatpush1.msra.mxu0 %v261
    %298 = vmatprep.subr.mxu0 0.0
    %299 = vmatpush1.msra.mxu0 %v262
    %300 = vmatprep.subr.mxu0 0.0
    %301 = vmatpush1.msra.mxu0 %v263
    %302 = vmatprep.subr.mxu0 0.0
    %303 = vmatpush1.msra.mxu0 %v264
    %304 = vmatprep.subr.mxu0 0.0
    %305 = vmatpush1.msra.mxu0 0.0
    %306 = vmatprep.subr.mxu0 0.0
    %307 = vmatpush1.msra.mxu0 0.0
    %308 = vmatprep.subr.mxu0 0.0
    %309 = vmatpush1.msra.mxu0 0.0
    %310 = vmatprep.subr.mxu0 0.0
    %311 = vmatpush1.msra.mxu0 0.0
    %312 = vmatprep.subr.mxu0 0.0
    %313 = vmatpush1.msra.mxu0 0.0
    %314 = vmatprep.subr.mxu0 0.0
    %315 = vmatpush1.msra.mxu0 0.0
    %316 = vmatprep.subr.mxu0 0.0
    %317 = vmatpush1.msra.mxu0 0.0
    %318 = vmatprep.subr.mxu0 0.0
    %319 = vmatpush1.msra.mxu0 0.0
    %320 = vmatprep.subr.mxu0 0.0
    %321 = vmatpush1.msra.mxu0 0.0
    %322 = vmatprep.subr.mxu0 0.0
    %323 = vmatpush1.msra.mxu0 0.0
    %324 = vmatprep.subr.mxu0 0.0
    %325 = vmatpush1.msra.mxu0 0.0
    %326 = vmatprep.subr.mxu0 0.0
    %327 = vmatpush1.msra.mxu0 0.0
    %328 = vmatprep.subr.mxu0 0.0
    %329 = vmatpush1.msra.mxu0 0.0
    %330 = vmatprep.subr.mxu0 0.0
    %331 = vmatpush1.msra.mxu0 0.0
    %332 = vmatprep.subr.mxu0 0.0
    %333 = vmatpush1.msra.mxu0 0.0
    %334 = vmatprep.subr.mxu0 0.0
    %335 = vmatpush1.msra.mxu0 0.0
    %336 = vmatprep.mubr.f32.mxu0 0.0
    %337 = vmatmul.mubr.f32.gmra.mrb[0].mxu0 %v248
    %v338 = vpop.f32.mrb[0].mxu0
    %v339 = vadd.f32 %v270, %v338
    %v340 = vpop.f32.mrb[0].mxu0
    %341 = vdwg.mxu0
    %v342 = vmax.f32 %v339, 0.0
    %v343 = vld [vmem:[#allocation2 + $0x20] sm:$0xff]
    %v344 = vld [vmem:[#allocation2 + $0x58] sm:$0xff]
    %v345 = vld [vmem:[#allocation2 + $0x90] sm:$0xff]
    %v346 = vld [vmem:[#allocation2 + $0xc8] sm:$0xff]
    %v347 = vld [vmem:[#allocation2 + $0x100] sm:$0xff]
    %v348 = vld [vmem:[#allocation2 + $0x138] sm:$0xff]
    %v349 = vld [vmem:[#allocation2 + $0x170] sm:$0xff]
    %v350 = vld [vmem:[#allocation2 + $0x1a8] sm:$0xff]
    %v351 = vld [vmem:[#allocation2 + $0x1e0] sm:$0xff]
    %v352 = vld [vmem:[#allocation2 + $0x218] sm:$0xff]
    %v353 = vld [vmem:[#allocation2 + $0x250] sm:$0xff]
    %v354 = vld [vmem:[#allocation2 + $0x288] sm:$0xff]
    %v355 = vld [vmem:[#allocation2 + $0x2c0] sm:$0xff]
    %v356 = vld [vmem:[#allocation2 + $0x2f8] sm:$0xff]
    %v357 = vld [vmem:[#allocation2 + $0x330] sm:$0xff]
    %v358 = vld [vmem:[#allocation2 + $0x368] sm:$0xff]
    %v359 = vld [vmem:[%s1 + $0x4] sm:$0x1]
    %v361 = vlaneseq
    %v362 = vshrl.u32 %v361, 7
    %v363 = vsub.s32 0, %v362
    %v364 = vrot.slane %v359, %v363
    %366 = vmatprep.subr.mxu0 0.0
    %367 = vmatpush1.msra.mxu0 %v343
    %368 = vmatprep.subr.mxu0 0.0
    %369 = vmatpush1.msra.mxu0 %v344
    %370 = vmatprep.subr.mxu0 0.0
    %371 = vmatpush1.msra.mxu0 %v345
    %372 = vmatprep.subr.mxu0 0.0
    %373 = vmatpush1.msra.mxu0 %v346
    %374 = vmatprep.subr.mxu0 0.0
    %375 = vmatpush1.msra.mxu0 %v347
    %376 = vmatprep.subr.mxu0 0.0
    %377 = vmatpush1.msra.mxu0 %v348
    %378 = vmatprep.subr.mxu0 0.0
    %379 = vmatpush1.msra.mxu0 %v349
    %380 = vmatprep.subr.mxu0 0.0
    %381 = vmatpush1.msra.mxu0 %v350
    %382 = vmatprep.subr.mxu0 0.0
    %383 = vmatpush1.msra.mxu0 %v351
    %384 = vmatprep.subr.mxu0 0.0
    %385 = vmatpush1.msra.mxu0 %v352
    %386 = vmatprep.subr.mxu0 0.0
    %387 = vmatpush1.msra.mxu0 %v353
    %388 = vmatprep.subr.mxu0 0.0
    %389 = vmatpush1.msra.mxu0 %v354
    %390 = vmatprep.subr.mxu0 0.0
    %391 = vmatpush1.msra.mxu0 %v355
    %392 = vmatprep.subr.mxu0 0.0
    %393 = vmatpush1.msra.mxu0 %v356
    %394 = vmatprep.subr.mxu0 0.0
    %395 = vmatpush1.msra.mxu0 %v357
    %396 = vmatprep.subr.mxu0 0.0
    %397 = vmatpush1.msra.mxu0 %v358
    %398 = vmatprep.subr.mxu0 0.0
    %399 = vmatpush1.msra.mxu0 0.0
    %400 = vmatprep.subr.mxu0 0.0
    %401 = vmatpush1.msra.mxu0 0.0
    %402 = vmatprep.subr.mxu0 0.0
    %403 = vmatpush1.msra.mxu0 0.0
    %404 = vmatprep.subr.mxu0 0.0
    %405 = vmatpush1.msra.mxu0 0.0
    %406 = vmatprep.subr.mxu0 0.0
    %407 = vmatpush1.msra.mxu0 0.0
    %408 = vmatprep.subr.mxu0 0.0
    %409 = vmatpush1.msra.mxu0 0.0
    %410 = vmatprep.subr.mxu0 0.0
    %411 = vmatpush1.msra.mxu0 0.0
    %412 = vmatprep.subr.mxu0 0.0
    %413 = vmatpush1.msra.mxu0 0.0
    %414 = vmatprep.subr.mxu0 0.0
    %415 = vmatpush1.msra.mxu0 0.0
    %416 = vmatprep.subr.mxu0 0.0
    %417 = vmatpush1.msra.mxu0 0.0
    %418 = vmatprep.subr.mxu0 0.0
    %419 = vmatpush1.msra.mxu0 0.0
    %420 = vmatprep.subr.mxu0 0.0
    %421 = vmatpush1.msra.mxu0 0.0
    %422 = vmatprep.subr.mxu0 0.0
    %423 = vmatpush1.msra.mxu0 0.0
    %424 = vmatprep.subr.mxu0 0.0
    %425 = vmatpush1.msra.mxu0 0.0
    %426 = vmatprep.subr.mxu0 0.0
    %427 = vmatpush1.msra.mxu0 0.0
    %428 = vmatprep.subr.mxu0 0.0
    %429 = vmatpush1.msra.mxu0 0.0
    %430 = vmatprep.mubr.f32.mxu0 0.0
    %431 = vmatmul.mubr.f32.gmra.mrb[0].mxu0 %v342
    %v432 = vpop.f32.mrb[0].mxu0
    %v433 = vadd.f32 %v364, %v432
    %v434 = vpop.f32.mrb[0].mxu0
    %435 = vdwg.mxu0
    %v436 = vmax.f32 %v433, 0.0
    %v437 = vld [vmem:[#allocation2 + $0x28] sm:$0xff]
    %v438 = vld [vmem:[#allocation2 + $0x60] sm:$0xff]
    %v439 = vld [vmem:[#allocation2 + $0x98] sm:$0xff]
    %v440 = vld [vmem:[#allocation2 + $0xd0] sm:$0xff]
    %v441 = vld [vmem:[#allocation2 + $0x108] sm:$0xff]
    %v442 = vld [vmem:[#allocation2 + $0x140] sm:$0xff]
    %v443 = vld [vmem:[#allocation2 + $0x178] sm:$0xff]
    %v444 = vld [vmem:[#allocation2 + $0x1b0] sm:$0xff]
    %v445 = vld [vmem:[#allocation2 + $0x1e8] sm:$0xff]
    %v446 = vld [vmem:[#allocation2 + $0x220] sm:$0xff]
    %v447 = vld [vmem:[#allocation2 + $0x258] sm:$0xff]
    %v448 = vld [vmem:[#allocation2 + $0x290] sm:$0xff]
    %v449 = vld [vmem:[#allocation2 + $0x2c8] sm:$0xff]
    %v450 = vld [vmem:[#allocation2 + $0x300] sm:$0xff]
    %v451 = vld [vmem:[#allocation2 + $0x338] sm:$0xff]
    %v452 = vld [vmem:[#allocation2 + $0x370] sm:$0xff]
    %v453 = vld [vmem:[%s1 + $0x5] sm:$0x1]
    %v455 = vlaneseq
    %v456 = vshrl.u32 %v455, 7
    %v457 = vsub.s32 0, %v456
    %v458 = vrot.slane %v453, %v457
    %460 = vmatprep.subr.mxu0 0.0
    %461 = vmatpush1.msra.mxu0 %v437
    %462 = vmatprep.subr.mxu0 0.0
    %463 = vmatpush1.msra.mxu0 %v438
    %464 = vmatprep.subr.mxu0 0.0
    %465 = vmatpush1.msra.mxu0 %v439
    %466 = vmatprep.subr.mxu0 0.0
    %467 = vmatpush1.msra.mxu0 %v440
    %468 = vmatprep.subr.mxu0 0.0
    %469 = vmatpush1.msra.mxu0 %v441
    %470 = vmatprep.subr.mxu0 0.0
    %471 = vmatpush1.msra.mxu0 %v442
    %472 = vmatprep.subr.mxu0 0.0
    %473 = vmatpush1.msra.mxu0 %v443
    %474 = vmatprep.subr.mxu0 0.0
    %475 = vmatpush1.msra.mxu0 %v444
    %476 = vmatprep.subr.mxu0 0.0
    %477 = vmatpush1.msra.mxu0 %v445
    %478 = vmatprep.subr.mxu0 0.0
    %479 = vmatpush1.msra.mxu0 %v446
    %480 = vmatprep.subr.mxu0 0.0
    %481 = vmatpush1.msra.mxu0 %v447
    %482 = vmatprep.subr.mxu0 0.0
    %483 = vmatpush1.msra.mxu0 %v448
    %484 = vmatprep.subr.mxu0 0.0
    %485 = vmatpush1.msra.mxu0 %v449
    %486 = vmatprep.subr.mxu0 0.0
    %487 = vmatpush1.msra.mxu0 %v450
    %488 = vmatprep.subr.mxu0 0.0
    %489 = vmatpush1.msra.mxu0 %v451
    %490 = vmatprep.subr.mxu0 0.0
    %491 = vmatpush1.msra.mxu0 %v452
    %492 = vmatprep.subr.mxu0 0.0
    %493 = vmatpush1.msra.mxu0 0.0
    %494 = vmatprep.subr.mxu0 0.0
    %495 = vmatpush1.msra.mxu0 0.0
    %496 = vmatprep.subr.mxu0 0.0
    %497 = vmatpush1.msra.mxu0 0.0
    %498 = vmatprep.subr.mxu0 0.0
    %499 = vmatpush1.msra.mxu0 0.0
    %500 = vmatprep.subr.mxu0 0.0
    %501 = vmatpush1.msra.mxu0 0.0
    %502 = vmatprep.subr.mxu0 0.0
    %503 = vmatpush1.msra.mxu0 0.0
    %504 = vmatprep.subr.mxu0 0.0
    %505 = vmatpush1.msra.mxu0 0.0
    %506 = vmatprep.subr.mxu0 0.0
    %507 = vmatpush1.msra.mxu0 0.0
    %508 = vmatprep.subr.mxu0 0.0
    %509 = vmatpush1.msra.mxu0 0.0
    %510 = vmatprep.subr.mxu0 0.0
    %511 = vmatpush1.msra.mxu0 0.0
    %512 = vmatprep.subr.mxu0 0.0
    %513 = vmatpush1.msra.mxu0 0.0
    %514 = vmatprep.subr.mxu0 0.0
    %515 = vmatpush1.msra.mxu0 0.0
    %516 = vmatprep.subr.mxu0 0.0
    %517 = vmatpush1.msra.mxu0 0.0
    %518 = vmatprep.subr.mxu0 0.0
    %519 = vmatpush1.msra.mxu0 0.0
    %520 = vmatprep.subr.mxu0 0.0
    %521 = vmatpush1.msra.mxu0 0.0
    %522 = vmatprep.subr.mxu0 0.0
    %523 = vmatpush1.msra.mxu0 0.0
    %524 = vmatprep.mubr.f32.mxu0 0.0
    %525 = vmatmul.mubr.f32.gmra.mrb[0].mxu0 %v436
    %v526 = vpop.f32.mrb[0].mxu0
    %v527 = vadd.f32 %v458, %v526
    %v528 = vpop.f32.mrb[0].mxu0
    %529 = vdwg.mxu0
    %v530 = vmax.f32 %v527, 0.0
    %v531 = vld [vmem:[#allocation2 + $0x30] sm:$0xff]
    %v532 = vld [vmem:[#allocation2 + $0x68] sm:$0xff]
    %v533 = vld [vmem:[#allocation2 + $0xa0] sm:$0xff]
    %v534 = vld [vmem:[#allocation2 + $0xd8] sm:$0xff]
    %v535 = vld [vmem:[#allocation2 + $0x110] sm:$0xff]
    %v536 = vld [vmem:[#allocation2 + $0x148] sm:$0xff]
    %v537 = vld [vmem:[#allocation2 + $0x180] sm:$0xff]
    %v538 = vld [vmem:[#allocation2 + $0x1b8] sm:$0xff]
    %v539 = vld [vmem:[#allocation2 + $0x1f0] sm:$0xff]
    %v540 = vld [vmem:[#allocation2 + $0x228] sm:$0xff]
    %v541 = vld [vmem:[#allocation2 + $0x260] sm:$0xff]
    %v542 = vld [vmem:[#allocation2 + $0x298] sm:$0xff]
    %v543 = vld [vmem:[#allocation2 + $0x2d0] sm:$0xff]
    %v544 = vld [vmem:[#allocation2 + $0x308] sm:$0xff]
    %v545 = vld [vmem:[#allocation2 + $0x340] sm:$0xff]
    %v546 = vld [vmem:[#allocation2 + $0x378] sm:$0xff]
    %v547 = vld [vmem:[%s1 + $0x6] sm:$0x1]
    %v549 = vlaneseq
    %v550 = vshrl.u32 %v549, 7
    %v551 = vsub.s32 0, %v550
    %v552 = vrot.slane %v547, %v551
    %554 = vmatprep.subr.mxu0 0.0
    %555 = vmatpush1.msra.mxu0 %v531
    %556 = vmatprep.subr.mxu0 0.0
    %557 = vmatpush1.msra.mxu0 %v532
    %558 = vmatprep.subr.mxu0 0.0
    %559 = vmatpush1.msra.mxu0 %v533
    %560 = vmatprep.subr.mxu0 0.0
    %561 = vmatpush1.msra.mxu0 %v534
    %562 = vmatprep.subr.mxu0 0.0
    %563 = vmatpush1.msra.mxu0 %v535
    %564 = vmatprep.subr.mxu0 0.0
    %565 = vmatpush1.msra.mxu0 %v536
    %566 = vmatprep.subr.mxu0 0.0
    %567 = vmatpush1.msra.mxu0 %v537
    %568 = vmatprep.subr.mxu0 0.0
    %569 = vmatpush1.msra.mxu0 %v538
    %570 = vmatprep.subr.mxu0 0.0
    %571 = vmatpush1.msra.mxu0 %v539
    %572 = vmatprep.subr.mxu0 0.0
    %573 = vmatpush1.msra.mxu0 %v540
    %574 = vmatprep.subr.mxu0 0.0
    %575 = vmatpush1.msra.mxu0 %v541
    %576 = vmatprep.subr.mxu0 0.0
    %577 = vmatpush1.msra.mxu0 %v542
    %578 = vmatprep.subr.mxu0 0.0
    %579 = vmatpush1.msra.mxu0 %v543
    %580 = vmatprep.subr.mxu0 0.0
    %581 = vmatpush1.msra.mxu0 %v544
    %582 = vmatprep.subr.mxu0 0.0
    %583 = vmatpush1.msra.mxu0 %v545
    %584 = vmatprep.subr.mxu0 0.0
    %585 = vmatpush1.msra.mxu0 %v546
    %586 = vmatprep.subr.mxu0 0.0
    %587 = vmatpush1.msra.mxu0 0.0
    %588 = vmatprep.subr.mxu0 0.0
    %589 = vmatpush1.msra.mxu0 0.0
    %590 = vmatprep.subr.mxu0 0.0
    %591 = vmatpush1.msra.mxu0 0.0
    %592 = vmatprep.subr.mxu0 0.0
    %593 = vmatpush1.msra.mxu0 0.0
    %594 = vmatprep.subr.mxu0 0.0
    %595 = vmatpush1.msra.mxu0 0.0
    %596 = vmatprep.subr.mxu0 0.0
    %597 = vmatpush1.msra.mxu0 0.0
    %598 = vmatprep.subr.mxu0 0.0
    %599 = vmatpush1.msra.mxu0 0.0
    %600 = vmatprep.subr.mxu0 0.0
    %601 = vmatpush1.msra.mxu0 0.0
    %602 = vmatprep.subr.mxu0 0.0
    %603 = vmatpush1.msra.mxu0 0.0
    %604 = vmatprep.subr.mxu0 0.0
    %605 = vmatpush1.msra.mxu0 0.0
    %606 = vmatprep.subr.mxu0 0.0
    %607 = vmatpush1.msra.mxu0 0.0
    %608 = vmatprep.subr.mxu0 0.0
    %609 = vmatpush1.msra.mxu0 0.0
    %610 = vmatprep.subr.mxu0 0.0
    %611 = vmatpush1.msra.mxu0 0.0
    %612 = vmatprep.subr.mxu0 0.0
    %613 = vmatpush1.msra.mxu0 0.0
    %614 = vmatprep.subr.mxu0 0.0
    %615 = vmatpush1.msra.mxu0 0.0
    %616 = vmatprep.subr.mxu0 0.0
    %617 = vmatpush1.msra.mxu0 0.0
    %618 = vmatprep.mubr.f32.mxu0 0.0
    %619 = vmatmul.mubr.f32.gmra.mrb[0].mxu0 %v530
    %v620 = vpop.f32.mrb[0].mxu0
    %v621 = vadd.f32 %v552, %v620
    %v622 = vpop.f32.mrb[0].mxu0
    %623 = vdwg.mxu0
    %vm624 = vcmask 64512
    %625 = vst.msk [vmem:[#allocation5] sm:$0xff] %vm624, %v621
    // Predicated region
    $region18: #{tpu_custom_call.1} parent=1 // pred_check
      _
    $region19: #{tpu_custom_call.1} parent=1 // pred_check_branch
      %627 = sbr.rel (0) target = $region21
    $region20: #{tpu_custom_call.1} parent=1 // pred_region
      %s629 = ssub.s32 128, 128
      %630 = vsyncadd [#allocation4], %s629
      %s632 = sshll.u32 [#allocation5], 4
      %s633 = int_to_ptr.vmem [resolvable:$true] %s632
      %635 = dma.vmem_to_hbm [thread:$0]  %s633, 128, %s3, [#allocation4]
    $region21: #{tpu_custom_call.1} parent=1 // pred_fallthru
      _
    // Predicated region
    $region22: #{tpu_custom_call.1} parent=1 // pred_check
      _
    $region23: #{tpu_custom_call.1} parent=1 // pred_check_branch
      %637 = sbr.rel (0) target = $region25
    $region24: #{tpu_custom_call.1} parent=1 // pred_region
      %638 = dma.done [#allocation4], 128
    $region25: #{tpu_custom_call.1} parent=1 // pred_fallthru
      _
    %639 = vsyncpa [#allocation3], 1
    %640 = vsyncpa [#allocation4], 1

</llo_original>
